<compile_context>
chip_gen: v7x
topology: tpu7x:2x2x1
jax: 0.10.0
libtpu: 0.0.40
codegen_flags: <defaults>
</compile_context>

<pallas_src>
import jax
import jax.numpy as jnp
from jax.experimental import pallas as pl
from jax.experimental.pallas import tpu as pltpu


# ----------------------------- helpers --------------------------------------

def _round_up(x, m):
    return (x + m - 1) // m * m


def _cdiv(a, b):
    return (a + b - 1) // b


def _vmem_cap_bytes():
    """Physical VMEM minus headroom for Mosaic internal scratch."""
    phys = 64 * 1024 * 1024            # conservative default (v7x per-TC)
    try:
        info = pltpu.get_tpu_info()
        phys = int(getattr(info, "vmem_capacity_bytes", phys))
    except Exception:
        pass
    # headroom: v7x 64 -> 48 MiB, v5e/v6e 128 -> 112 MiB
    return max(phys - 16 * 1024 * 1024, 32 * 1024 * 1024)


def _pick_tile(dim, max_tile, align):
    """Largest tile <= max_tile that avoids padding when possible.

    If dim fits entirely, use the full dim (satisfies the (8,128) rule via the
    'equal to full array dim' branch and needs no pad). Otherwise prefer an
    aligned tile that divides dim evenly; fall back to max aligned tile (pad).
    """
    if dim <= max_tile:
        return dim
    t = (max_tile // align) * align
    while t >= align:
        if dim % t == 0:
            return t
        t -= align
    return (max_tile // align) * align


# ----------------------------- kernels --------------------------------------

def _matmul_bias_acc_kernel(x_ref, w_ref, b_ref, o_ref, acc_ref):
    """Shared head, non-f32 output: f32 scratch accumulator, cast on finalize."""
    k = pl.program_id(2)

    @pl.when(k == 0)
    def _init():
        acc_ref[...] = jnp.zeros_like(acc_ref)

    acc_ref[...] += jnp.dot(x_ref[...], w_ref[...],
                            preferred_element_type=jnp.float32)

    @pl.when(k == pl.num_programs(2) - 1)
    def _fin():
        o_ref[...] = (acc_ref[...] + b_ref[...].astype(jnp.float32)).astype(o_ref.dtype)


def _matmul_bias_f32out_kernel(x_ref, w_ref, b_ref, o_ref):
    """Shared head, f32 output: accumulate directly into the resident out block."""
    k = pl.program_id(2)

    @pl.when(k == 0)
    def _init():
        o_ref[...] = jnp.zeros_like(o_ref)

    o_ref[...] += jnp.dot(x_ref[...], w_ref[...],
                          preferred_element_type=jnp.float32)

    @pl.when(k == pl.num_programs(2) - 1)
    def _fin():
        o_ref[...] += b_ref[...].astype(jnp.float32)


def _individual_acc_kernel(x_ref, w_ref, b_ref, o_ref, acc_ref):
    # x: (TB, G, TK), w: (G, TK, Hp), b: (G, 1, Hp), o/acc: (G, TB, Hp)
    k = pl.program_id(2)

    @pl.when(k == 0)
    def _init():
        acc_ref[...] = jnp.zeros_like(acc_ref)

    G = w_ref.shape[0]
    for g in range(G):                 # G is small; static unroll, ref-indexed loads
        acc_ref[g] += jnp.dot(x_ref[:, g, :], w_ref[g],
                              preferred_element_type=jnp.float32)

    @pl.when(k == pl.num_programs(2) - 1)
    def _fin():
        o_ref[...] = (acc_ref[...] + b_ref[...].astype(jnp.float32)).astype(o_ref.dtype)


# ----------------------------- wrappers -------------------------------------

def flatten_head_shared(x, w, b, *, min_macs=1 << 20,
                        compute_dtype=jnp.bfloat16):
    """Non-individual head.  x:[B,C,D,P], w:[nf,H], b:[H] -> [B,C,H]."""
    B, C, D, P = x.shape
    nf = D * P
    H = w.shape[-1]
    M = B * C
    out_dtype = x.dtype

    if M * nf * H < min_macs:
        # toy regime: a fused XLA GEMM beats kernel-launch + per-step overhead
        return (x.reshape(B, C, nf) @ w + b).astype(out_dtype)

    if compute_dtype is not None and x.dtype != compute_dtype:
        x = x.astype(compute_dtype)
        w = w.astype(compute_dtype)

    x2 = x.reshape(M, nf)
    in_bytes = x2.dtype.itemsize
    out_bytes = jnp.dtype(out_dtype).itemsize
    align_m = 16 if in_bytes < 4 else 8          # bf16 sublane pack

    cap = _vmem_cap_bytes()
    budget = int(cap * 0.75)

    Hp = _round_up(H, 128)                       # lane-dense output stores
    TN = Hp if Hp <= 1024 else _pick_tile(Hp, 1024, 128)

    tk_max, tm_max = 2048, 512
    while True:
        TK = _pick_tile(nf, tk_max, 128)
        TM = _pick_tile(M, tm_max, align_m)
        need = (2 * (TM * TK + TK * TN) * in_bytes       # double-buffered x, w
                + 2 * TN * 4                             # bias
                + 2 * TM * TN * out_bytes                # double-buffered out
                + (0 if out_dtype == jnp.float32 else TM * TN * 4))
        if need <= budget or (tk_max <= 128 and tm_max <= 64):
            break
        if tk_max > 128:
            tk_max //= 2
        else:
            tm_max = max(tm_max // 2, 64)

    # Megacore (v7x): when the parallel grid collapses to 1x1, split M so at
    # least two blocks exist on a parallel axis.
    if _cdiv(M, TM) == 1 and _cdiv(Hp, TN) == 1 and M >= 2 * align_m:
        TM = _round_up(_cdiv(M, 2), align_m)

    Mp = _round_up(M, TM)
    Kp = _round_up(nf, TK)
    Np = _round_up(Hp, TN)

    if (Mp, Kp) != (M, nf):
        x2 = jnp.pad(x2, ((0, Mp - M), (0, Kp - nf)))
    wp = w if (Kp, Np) == (nf, H) else jnp.pad(w, ((0, Kp - nf), (0, Np - H)))
    bp = (b if Np == H else jnp.pad(b, (0, Np - H))).reshape(1, Np)

    grid = (Mp // TM, Np // TN, Kp // TK)

    cost = pl.CostEstimate(
        flops=2 * M * nf * H,
        transcendentals=0,
        bytes_accessed=(M * nf * in_bytes + nf * H * in_bytes
                        + H * 4 + M * H * out_bytes))

    if out_dtype == jnp.float32:
        kernel, scratch = _matmul_bias_f32out_kernel, []
    else:
        kernel, scratch = _matmul_bias_acc_kernel, [pltpu.VMEM((TM, TN), jnp.float32)]

    out = pl.pallas_call(
        kernel,
        out_shape=jax.ShapeDtypeStruct((Mp, Np), out_dtype),
        grid=grid,
        in_specs=[
            pl.BlockSpec((TM, TK), lambda i, j, k: (i, k)),
            pl.BlockSpec((TK, TN), lambda i, j, k: (k, j)),
            pl.BlockSpec((1, TN), lambda i, j, k: (0, j)),
        ],
        out_specs=pl.BlockSpec((TM, TN), lambda i, j, k: (i, j)),
        scratch_shapes=scratch,
        compiler_params=pltpu.CompilerParams(
            dimension_semantics=("parallel", "parallel", "arbitrary"),
            vmem_limit_bytes=int(cap)),
        cost_estimate=cost,
    )(x2, wp, bp)

    if (Mp, Np) != (M, H):
        out = out[:M, :H]
    return out.reshape(B, C, H)


def flatten_head_individual(x, w, b, *, min_macs=1 << 20,
                            compute_dtype=jnp.bfloat16,
                            channels_last=True):
    """Individual head.  x:[B,C,D,P], w:[C,nf,H], b:[C,H] -> [B,H,C]."""
    B, C, D, P = x.shape
    nf = D * P
    H = w.shape[-1]
    out_dtype = x.dtype

    if B * C * nf * H < min_macs:
        z = x.reshape(B, C, nf)
        out = (jnp.einsum("bcn,cnh->bch", z, w) + b[None]).astype(out_dtype)
        return jnp.transpose(out, (0, 2, 1)) if channels_last else out

    if compute_dtype is not None and x.dtype != compute_dtype:
        x = x.astype(compute_dtype)
        w = w.astype(compute_dtype)

    # No wrapper transpose of activations: the channel walk happens in the
    # BlockSpec index_map (pure DMA addressing).
    x3 = x.reshape(B, C, nf)
    in_bytes = x3.dtype.itemsize
    out_bytes = jnp.dtype(out_dtype).itemsize

    Hp = _round_up(H, 128)                       # lane-dense stores

    # Channel grouping: full C when small (block second-minor dim == full array
    # dim satisfies the (8,128) rule); otherwise groups of 8 with channel pad.
    if C <= 8:
        G, Cp = C, C
    else:
        G = 8
        Cp = _round_up(C, G)

    cap = _vmem_cap_bytes()
    budget = int(cap * 0.75)

    tb_max, tk_max = 256, 2048
    while True:
        TB = _pick_tile(B, tb_max, 8)
        TK = _pick_tile(nf, tk_max, 128)
        need = (2 * TB * G * TK * in_bytes       # x blocks (double-buffered)
                + 2 * G * TK * Hp * in_bytes     # weight blocks
                + 2 * G * Hp * 4                 # bias
                + 2 * G * TB * Hp * out_bytes    # out blocks
                + G * TB * Hp * 4)               # f32 accumulator
        if need <= budget or (tk_max <= 128 and tb_max <= 8):
            break
        if tk_max > 128:
            tk_max //= 2
        else:
            tb_max = max(tb_max // 2, 8)

    Bp = _round_up(B, TB)
    Kp = _round_up(nf, TK)

    if (Bp, Cp, Kp) != (B, C, nf):
        x3 = jnp.pad(x3, ((0, Bp - B), (0, Cp - C), (0, Kp - nf)))
    wp = w if (Cp, Kp, Hp) == (C, nf, H) else jnp.pad(
        w, ((0, Cp - C), (0, Kp - nf), (0, Hp - H)))
    bp = (b if (Cp, Hp) == (C, H) else jnp.pad(
        b, ((0, Cp - C), (0, Hp - H)))).reshape(Cp, 1, Hp)

    grid = (Cp // G, Bp // TB, Kp // TK)

    # Deeper buffering only when the K grid is deep AND the per-block weight
    # slab is small enough that an extra buffer genuinely fits.
    w_block_bytes = G * TK * Hp * in_bytes
    w_spec = pl.BlockSpec((G, TK, Hp), lambda c, bi, k: (c, k, 0))
    if (grid[2] >= 3 and hasattr(pl, "Buffered")
            and w_block_bytes <= 4 * 1024 * 1024
            and need + w_block_bytes <= budget):
        try:
            w_spec = pl.BlockSpec((G, TK, Hp), lambda c, bi, k: (c, k, 0),
                                  pipeline_mode=pl.Buffered(3))
        except TypeError:
            pass

    cost = pl.CostEstimate(
        flops=2 * B * C * nf * H,
        transcendentals=0,
        bytes_accessed=(B * C * nf * in_bytes + C * nf * H * in_bytes
                        + C * H * 4 + B * C * H * out_bytes))

    out = pl.pallas_call(
        _individual_acc_kernel,
        out_shape=jax.ShapeDtypeStruct((Cp, Bp, Hp), out_dtype),
        grid=grid,
        in_specs=[
            pl.BlockSpec((TB, G, TK), lambda c, bi, k: (bi, c, k)),
            w_spec,
            pl.BlockSpec((G, 1, Hp), lambda c, bi, k: (c, 0, 0)),
        ],
        out_specs=pl.BlockSpec((G, TB, Hp), lambda c, bi, k: (c, bi, 0)),
        scratch_shapes=[pltpu.VMEM((G, TB, Hp), jnp.float32)],
        compiler_params=pltpu.CompilerParams(
            dimension_semantics=("parallel", "parallel", "arbitrary"),
            vmem_limit_bytes=int(cap)),
        cost_estimate=cost,
    )(x3, wp, bp)

    if (Cp, Bp, Hp) != (C, B, H):
        out = out[:C, :B, :H]                    # (C, B, H)
    if not channels_last:
        return jnp.transpose(out, (1, 0, 2))     # (B, C, H)
    # TODO(synk): torch.stack(dim=-1) semantics force a lane-sparse [B,H,C]
    # transpose here; pass channels_last=False if the consumer accepts [B,C,H].
    return jnp.transpose(out, (1, 2, 0))         # (B, H, C)


# ----------------------------- references -----------------------------------

def _ref_shared(x, w, b):
    B, C, D, P = x.shape
    return x.reshape(B, C, D * P) @ w + b


def _ref_individual(x, w, b):
    B, C, D, P = x.shape
    z = x.reshape(B, C, D * P)                          # [B, C, nf]
    out = jnp.einsum("bcn,cnh->bch", z, w) + b[None]    # [B, C, H]
    return jnp.transpose(out, (0, 2, 1))                # [B, H, C]


# ----------------------------- main -----------------------------------------

if __name__ == "__main__":
    key = jax.random.PRNGKey(0)

    B, c_in, d_model, patch_num = 2, 4, 16, 8
    nf = d_model * patch_num          # 128
    pred_horizon = 32

    k_x, k_w, k_b, k_wi, k_bi = jax.random.split(key, 5)
    x = jax.random.normal(k_x, (B, c_in, d_model, patch_num), dtype=jnp.float32)

    # shared (individual=False) parameters: Linear(nf, pred_horizon)
    w = jax.random.normal(k_w, (nf, pred_horizon), dtype=jnp.float32) * 0.02
    b = jax.random.normal(k_b, (pred_horizon,), dtype=jnp.float32) * 0.02

    # individual=True parameters: one Linear(nf, pred_horizon) per channel
    w_ind = jax.random.normal(k_wi, (c_in, nf, pred_horizon), dtype=jnp.float32) * 0.02
    b_ind = jax.random.normal(k_bi, (c_in, pred_horizon), dtype=jnp.float32) * 0.02

    ref_s = _ref_shared(x, w, b)
    ref_i = _ref_individual(x, w_ind, b_ind)

    # f32-compute path: exact check (min_macs=0 forces the Pallas kernels)
    y_s32 = jax.block_until_ready(
        flatten_head_shared(x, w, b, min_macs=0, compute_dtype=None))
    assert y_s32.shape == (B, c_in, pred_horizon)
    assert jnp.allclose(y_s32, ref_s, atol=1e-5, rtol=1e-5)

    y_i32 = jax.block_until_ready(
        flatten_head_individual(x, w_ind, b_ind, min_macs=0, compute_dtype=None))
    assert y_i32.shape == (B, pred_horizon, c_in)
    assert jnp.allclose(y_i32, ref_i, atol=1e-5, rtol=1e-5)

    # default bf16 MXU path: loose tolerance vs the f32 reference
    y_s = jax.block_until_ready(flatten_head_shared(x, w, b, min_macs=0))
    assert y_s.shape == (B, c_in, pred_horizon)
    assert y_s.dtype == x.dtype
    assert jnp.allclose(y_s, ref_s, atol=2e-2, rtol=2e-2)

    y_i = jax.block_until_ready(flatten_head_individual(x, w_ind, b_ind, min_macs=0))
    assert y_i.shape == (B, pred_horizon, c_in)
    assert y_i.dtype == x.dtype
    assert jnp.allclose(y_i, ref_i, atol=2e-2, rtol=2e-2)

    print("KERNEL_OK")
</pallas_src>

<mosaic_0001>
module attributes {stable_mosaic.version = 11 : i64} {
  func.func @_matmul_bias_f32out_kernel(%arg0: i32, %arg1: i32, %arg2: i32, %arg3: memref<8x128xf32, #tpu.memory_space<vmem>>, %arg4: memref<128x128xf32, #tpu.memory_space<vmem>>, %arg5: memref<1x128xf32, #tpu.memory_space<vmem>>, %arg6: memref<8x128xf32, #tpu.memory_space<vmem>>) attributes {dimension_semantics = [#tpu.dimension_semantics<parallel>, #tpu.dimension_semantics<parallel>, #tpu.dimension_semantics<arbitrary>], iteration_bounds = array<i64: 1, 1, 1>, scalar_prefetch = 0 : i64, scratch_operands = 0 : i64, tpu.core_type = #tpu.core_type<tc>, window_params = [{transform_indices = @transform_0, window_bounds = array<i64: 8, 128>}, {transform_indices = @transform_1, window_bounds = array<i64: 128, 128>}, {transform_indices = @transform_2, window_bounds = array<i64: 1, 128>}, {transform_indices = @transform_3, window_bounds = array<i64: 8, 128>}]} {
    %c0_i32 = arith.constant 0 : i32
    %0 = arith.cmpi eq, %arg2, %c0_i32 : i32
    %1 = arith.extui %0 : i1 to i32
    %c0_i32_0 = arith.constant 0 : i32
    %2 = arith.cmpi ne, %1, %c0_i32_0 : i32
    scf.if %2 {
      %cst_10 = arith.constant 0.000000e+00 : f32
      %12 = vector.broadcast %cst_10 : f32 to vector<8x128xf32>
      %c0_11 = arith.constant 0 : index
      %c0_12 = arith.constant 0 : index
      %13 = vector.load %arg6[%c0_11, %c0_12] : memref<8x128xf32, #tpu.memory_space<vmem>>, vector<8x128xf32>
      tpu.vector_store %arg6[%c0_11, %c0_12], %12 {strides = array<i32>} : memref<8x128xf32, #tpu.memory_space<vmem>>, vector<8x128xf32>,
    } else {
    }
    %c0 = arith.constant 0 : index
    %c0_1 = arith.constant 0 : index
    %3 = vector.load %arg6[%c0, %c0_1] : memref<8x128xf32, #tpu.memory_space<vmem>>, vector<8x128xf32>
    %c0_2 = arith.constant 0 : index
    %c0_3 = arith.constant 0 : index
    %4 = vector.load %arg3[%c0_2, %c0_3] : memref<8x128xf32, #tpu.memory_space<vmem>>, vector<8x128xf32>
    %c0_4 = arith.constant 0 : index
    %c0_5 = arith.constant 0 : index
    %5 = vector.load %arg4[%c0_4, %c0_5] : memref<128x128xf32, #tpu.memory_space<vmem>>, vector<128x128xf32>
    %cst = arith.constant dense<0.000000e+00> : vector<8x128xf32>
    %6 = tpu.matmul %4, %5, %cst {dimension_numbers = #tpu.dot_dimension_numbers<[1], [0], [0], [1], [0, 0, 1, 1], [], []>} : vector<8x128xf32>, vector<128x128xf32>, vector<8x128xf32> -> vector<8x128xf32>
    %7 = arith.addf %3, %6 : vector<8x128xf32>
    %c0_6 = arith.constant 0 : index
    %c0_7 = arith.constant 0 : index
    %8 = vector.load %arg6[%c0_6, %c0_7] : memref<8x128xf32, #tpu.memory_space<vmem>>, vector<8x128xf32>
    tpu.vector_store %arg6[%c0_6, %c0_7], %7 {strides = array<i32>} : memref<8x128xf32, #tpu.memory_space<vmem>>, vector<8x128xf32>,
    %c0_i32_8 = arith.constant 0 : i32
    %9 = arith.cmpi eq, %arg2, %c0_i32_8 : i32
    %10 = arith.extui %9 : i1 to i32
    %c0_i32_9 = arith.constant 0 : i32
    %11 = arith.cmpi ne, %10, %c0_i32_9 : i32
    scf.if %11 {
      %c0_10 = arith.constant 0 : index
      %c0_11 = arith.constant 0 : index
      %12 = vector.load %arg6[%c0_10, %c0_11] : memref<8x128xf32, #tpu.memory_space<vmem>>, vector<8x128xf32>
      %c0_12 = arith.constant 0 : index
      %c0_13 = arith.constant 0 : index
      %13 = vector.load %arg5[%c0_12, %c0_13] : memref<1x128xf32, #tpu.memory_space<vmem>>, vector<1x128xf32>
      %14 = vector.broadcast %13 : vector<1x128xf32> to vector<8x128xf32>
      %15 = arith.addf %12, %14 : vector<8x128xf32>
      %c0_14 = arith.constant 0 : index
      %c0_15 = arith.constant 0 : index
      %16 = vector.load %arg6[%c0_14, %c0_15] : memref<8x128xf32, #tpu.memory_space<vmem>>, vector<8x128xf32>
      tpu.vector_store %arg6[%c0_14, %c0_15], %15 {strides = array<i32>} : memref<8x128xf32, #tpu.memory_space<vmem>>, vector<8x128xf32>,
    } else {
    }
    return
  }
  func.func @transform_0(%arg0: i32, %arg1: i32, %arg2: i32) -> (i32, i32) {
    %c0_i32 = arith.constant 0 : i32
    return %arg0, %arg2 : i32, i32
  }
  func.func @transform_1(%arg0: i32, %arg1: i32, %arg2: i32) -> (i32, i32) {
    %c0_i32 = arith.constant 0 : i32
    return %arg2, %arg1 : i32, i32
  }
  func.func @transform_2(%arg0: i32, %arg1: i32, %arg2: i32) -> (i32, i32) {
    %c0_i32 = arith.constant 0 : i32
    %c0_i32_0 = arith.constant 0 : i32
    return %c0_i32, %arg1 : i32, i32
  }
  func.func @transform_3(%arg0: i32, %arg1: i32, %arg2: i32) -> (i32, i32) {
    %c0_i32 = arith.constant 0 : i32
    return %arg0, %arg1 : i32, i32
  }
}

</mosaic_0001>

<llo_original>
// kernel: tpu_custom_call.1
$region0: #{tpu_custom_call.1}
  #allocation0 [shape = 'u32[]', space=smem, size = 0x4, offset = 0x4, fixed_abs, tag = 'smem constant byte address 0x4 - core index']
  #allocation1 [shape = 'u32[144,128]{1,0:T(1,128)}', space=vmem, size = 0x12000, scoped, tag = 'internal scratch']
  %s0 = inlined_call_operand.hbm [shape: f32[8,128], index: 0, kind: input, shape index: {}]
  %s1 = inlined_call_operand.hbm [shape: f32[128,128], index: 1, kind: input, shape index: {}]
  %s2 = inlined_call_operand.vmem [shape: f32[1,128], index: 2, kind: input, shape index: {}]
  %s3 = inlined_call_operand.hbm [shape: f32[8,128], index: 3, kind: output, shape index: {}]
  %s4 = sld [smem:[#allocation0]]
  $region38: #{tpu_custom_call.1} parent=0
    _
  %s6 = ssub.s32 1, %s4
  %s7 = scalar_select 0, %s6, %s4
  $region1: #{tpu_custom_call.1} parent=0
    #allocation2 [shape = 'u8[4096]{0}', space=vmem, size = 0x1000, scoped, tag = 'input window, operand 0, single buffered']
    #allocation3 [shape = 's32[1]{0}', space=sflag, size = 0x4, scoped, tag = 'scoped memory for tpu_custom_call.1']
    #allocation4 [shape = 's32[1]{0}', space=sflag, size = 0x4, scoped, tag = 'scoped memory for tpu_custom_call.1']
    #allocation5 [shape = 'u8[65536]{0}', space=vmem, size = 0x10000, scoped, tag = 'input window, operand 1, single buffered']
    #allocation6 [shape = 's32[1]{0}', space=sflag, size = 0x4, scoped, tag = 'scoped memory for tpu_custom_call.1']
    #allocation7 [shape = 'u8[4096]{0}', space=vmem, size = 0x1000, scoped, tag = 'output window, operand 0, single buffered']
    %8 = vsyncpa [#allocation3], 0
    %9 = vsyncpa [#allocation6], 0
    %10 = vsyncpa [#allocation4], 0
    // Predicated region
    $region2: #{tpu_custom_call.1} parent=1 // pred_check
      _
    $region3: #{tpu_custom_call.1} parent=1 // pred_check_branch
      %12 = sbr.rel (0) target = $region5
    $region4: #{tpu_custom_call.1} parent=1 // pred_region
      %s14 = ssub.s32 128, 128
      %15 = vsyncadd [#allocation3], %s14
      %s17 = sshll.u32 [#allocation2], 4
      %s18 = int_to_ptr.vmem [resolvable:$true] %s17
      %20 = dma.hbm_to_vmem [thread:$0]  %s0, 128, %s18, [#allocation3]
    $region5: #{tpu_custom_call.1} parent=1 // pred_fallthru
      _
    // Predicated region
    $region6: #{tpu_custom_call.1} parent=1 // pred_check
      _
    $region7: #{tpu_custom_call.1} parent=1 // pred_check_branch
      %22 = sbr.rel (0) target = $region9
    $region8: #{tpu_custom_call.1} parent=1 // pred_region
      %s24 = ssub.s32 2048, 2048
      %25 = vsyncadd [#allocation6], %s24
      %s26 = sshll.u32 [#allocation5], 4
      %s27 = int_to_ptr.vmem [resolvable:$true] %s26
      %32 = dma.hbm_to_vmem [thread:$0]  %s1, 2048, %s27, [#allocation6], 128, 128, 8
    $region9: #{tpu_custom_call.1} parent=1 // pred_fallthru
      _
    // Predicated region
    $region10: #{tpu_custom_call.1} parent=1 // pred_check
      _
    $region11: #{tpu_custom_call.1} parent=1 // pred_check_branch
      %34 = sbr.rel (0) target = $region13
    $region12: #{tpu_custom_call.1} parent=1 // pred_region
      _
    $region13: #{tpu_custom_call.1} parent=1 // pred_fallthru
      _
    // Predicated region
    $region14: #{tpu_custom_call.1} parent=1 // pred_check
      _
    $region15: #{tpu_custom_call.1} parent=1 // pred_check_branch
      %36 = sbr.rel (0) target = $region17
    $region16: #{tpu_custom_call.1} parent=1 // pred_region
      %37 = dma.done [#allocation3], 128
    $region17: #{tpu_custom_call.1} parent=1 // pred_fallthru
      _
    // Predicated region
    $region18: #{tpu_custom_call.1} parent=1 // pred_check
      _
    $region19: #{tpu_custom_call.1} parent=1 // pred_check_branch
      %39 = sbr.rel (0) target = $region21
    $region20: #{tpu_custom_call.1} parent=1 // pred_region
      %40 = dma.done [#allocation6], 2048
    $region21: #{tpu_custom_call.1} parent=1 // pred_fallthru
      _
    %p41 = scmp.eq.s32.totalorder 0, 0
    // Predicated region
    $region22: #{tpu_custom_call.1} parent=1 // pred_check
      %p42 = pneg %p41
    $region23: #{tpu_custom_call.1} parent=1 // pred_check_branch
      %44 = sbr.rel (%p42) target = $region25
    $region24: #{tpu_custom_call.1} parent=1 // pred_region
      %45 = vst [vmem:[#allocation7] sm:$0xff] 0.0
    $region25: #{tpu_custom_call.1} parent=1 // pred_fallthru
      _
    %v46 = vld [vmem:[#allocation7] sm:$0xff]
    %v47 = vld [vmem:[#allocation2] sm:$0xff]
    %v48 = vld [vmem:[#allocation5] sm:$0xff]
    %v49 = vld [vmem:[#allocation5 + $0x8] sm:$0xff]
    %v50 = vld [vmem:[#allocation5 + $0x10] sm:$0xff]
    %v51 = vld [vmem:[#allocation5 + $0x18] sm:$0xff]
    %v52 = vld [vmem:[#allocation5 + $0x20] sm:$0xff]
    %v53 = vld [vmem:[#allocation5 + $0x28] sm:$0xff]
    %v54 = vld [vmem:[#allocation5 + $0x30] sm:$0xff]
    %v55 = vld [vmem:[#allocation5 + $0x38] sm:$0xff]
    %v56 = vld [vmem:[#allocation5 + $0x40] sm:$0xff]
    %v57 = vld [vmem:[#allocation5 + $0x48] sm:$0xff]
    %v58 = vld [vmem:[#allocation5 + $0x50] sm:$0xff]
    %v59 = vld [vmem:[#allocation5 + $0x58] sm:$0xff]
    %v60 = vld [vmem:[#allocation5 + $0x60] sm:$0xff]
    %v61 = vld [vmem:[#allocation5 + $0x68] sm:$0xff]
    %v62 = vld [vmem:[#allocation5 + $0x70] sm:$0xff]
    %v63 = vld [vmem:[#allocation5 + $0x78] sm:$0xff]
    %64 = vmatprep.subr.mxu0 0.0
    %65 = vmatpush1.msra.mxu0 %v48
    %66 = vmatprep.subr.mxu0 0.0
    %67 = vmatpush1.msra.mxu0 %v49
    %68 = vmatprep.subr.mxu0 0.0
    %69 = vmatpush1.msra.mxu0 %v50
    %70 = vmatprep.subr.mxu0 0.0
    %71 = vmatpush1.msra.mxu0 %v51
    %72 = vmatprep.subr.mxu0 0.0
    %73 = vmatpush1.msra.mxu0 %v52
    %74 = vmatprep.subr.mxu0 0.0
    %75 = vmatpush1.msra.mxu0 %v53
    %76 = vmatprep.subr.mxu0 0.0
    %77 = vmatpush1.msra.mxu0 %v54
    %78 = vmatprep.subr.mxu0 0.0
    %79 = vmatpush1.msra.mxu0 %v55
    %80 = vmatprep.subr.mxu0 0.0
    %81 = vmatpush1.msra.mxu0 %v56
    %82 = vmatprep.subr.mxu0 0.0
    %83 = vmatpush1.msra.mxu0 %v57
    %84 = vmatprep.subr.mxu0 0.0
    %85 = vmatpush1.msra.mxu0 %v58
    %86 = vmatprep.subr.mxu0 0.0
    %87 = vmatpush1.msra.mxu0 %v59
    %88 = vmatprep.subr.mxu0 0.0
    %89 = vmatpush1.msra.mxu0 %v60
    %90 = vmatprep.subr.mxu0 0.0
    %91 = vmatpush1.msra.mxu0 %v61
    %92 = vmatprep.subr.mxu0 0.0
    %93 = vmatpush1.msra.mxu0 %v62
    %94 = vmatprep.subr.mxu0 0.0
    %95 = vmatpush1.msra.mxu0 %v63
    %96 = vmatprep.subr.mxu0 0.0
    %97 = vmatpush1.msra.mxu0 0.0
    %98 = vmatprep.subr.mxu0 0.0
    %99 = vmatpush1.msra.mxu0 0.0
    %100 = vmatprep.subr.mxu0 0.0
    %101 = vmatpush1.msra.mxu0 0.0
    %102 = vmatprep.subr.mxu0 0.0
    %103 = vmatpush1.msra.mxu0 0.0
    %104 = vmatprep.subr.mxu0 0.0
    %105 = vmatpush1.msra.mxu0 0.0
    %106 = vmatprep.subr.mxu0 0.0
    %107 = vmatpush1.msra.mxu0 0.0
    %108 = vmatprep.subr.mxu0 0.0
    %109 = vmatpush1.msra.mxu0 0.0
    %110 = vmatprep.subr.mxu0 0.0
    %111 = vmatpush1.msra.mxu0 0.0
    %112 = vmatprep.subr.mxu0 0.0
    %113 = vmatpush1.msra.mxu0 0.0
    %114 = vmatprep.subr.mxu0 0.0
    %115 = vmatpush1.msra.mxu0 0.0
    %116 = vmatprep.subr.mxu0 0.0
    %117 = vmatpush1.msra.mxu0 0.0
    %118 = vmatprep.subr.mxu0 0.0
    %119 = vmatpush1.msra.mxu0 0.0
    %120 = vmatprep.subr.mxu0 0.0
    %121 = vmatpush1.msra.mxu0 0.0
    %122 = vmatprep.subr.mxu0 0.0
    %123 = vmatpush1.msra.mxu0 0.0
    %124 = vmatprep.subr.mxu0 0.0
    %125 = vmatpush1.msra.mxu0 0.0
    %126 = vmatprep.subr.mxu0 0.0
    %127 = vmatpush1.msra.mxu0 0.0
    %128 = vmatprep.mubr.f32.mxu0 0.0
    %129 = vmatmul.mubr.f32.gmra.mrb[0].mxu0 %v47
    %v130 = vpop.f32.mrb[0].mxu0
    %v131 = vadd.f32 0.0, %v130
    %v132 = vpop.f32.mrb[0].mxu0
    %133 = vdwg.mxu0
    %v134 = vadd.f32 %v46, %v131
    %135 = vst [vmem:[#allocation7] sm:$0xff] %v134
    // Predicated region
    $region26: #{tpu_custom_call.1} parent=1 // pred_check
      %p136 = pneg %p41
    $region27: #{tpu_custom_call.1} parent=1 // pred_check_branch
      %138 = sbr.rel (%p136) target = $region29
    $region28: #{tpu_custom_call.1} parent=1 // pred_region
      %v139 = vld [vmem:[#allocation7] sm:$0xff]
      %v140 = vld [vmem:[%s2] sm:$0x1]
      %v142 = vlaneseq
      %v143 = vshrl.u32 %v142, 7
      %v144 = vsub.s32 0, %v143
      %v145 = vrot.slane %v140, %v144
      %v147 = vadd.f32 %v139, %v145
      %148 = vst [vmem:[#allocation7] sm:$0xff] %v147
    $region29: #{tpu_custom_call.1} parent=1 // pred_fallthru
      _
    // Predicated region
    $region30: #{tpu_custom_call.1} parent=1 // pred_check
      _
    $region31: #{tpu_custom_call.1} parent=1 // pred_check_branch
      %150 = sbr.rel (0) target = $region33
    $region32: #{tpu_custom_call.1} parent=1 // pred_region
      %s152 = ssub.s32 128, 128
      %153 = vsyncadd [#allocation4], %s152
      %s155 = sshll.u32 [#allocation7], 4
      %s156 = int_to_ptr.vmem [resolvable:$true] %s155
      %158 = dma.vmem_to_hbm [thread:$0]  %s156, 128, %s3, [#allocation4]
    $region33: #{tpu_custom_call.1} parent=1 // pred_fallthru
      _
    // Predicated region
    $region34: #{tpu_custom_call.1} parent=1 // pred_check
      _
    $region35: #{tpu_custom_call.1} parent=1 // pred_check_branch
      %160 = sbr.rel (0) target = $region37
    $region36: #{tpu_custom_call.1} parent=1 // pred_region
      %161 = dma.done [#allocation4], 128
    $region37: #{tpu_custom_call.1} parent=1 // pred_fallthru
      _
    %162 = vsyncpa [#allocation3], 1
    %163 = vsyncpa [#allocation6], 1
    %164 = vsyncpa [#allocation4], 1

</llo_original>
